<compile_context>
chip_gen: v6e
topology: v6e:2x2x1
jax: 0.10.0
libtpu: 0.0.40
codegen_flags: <defaults>
</compile_context>

<pallas_src>
import functools

import jax
import jax.numpy as jnp
import numpy as np
from jax import lax
from jax.experimental import pallas as pl
from jax.experimental.pallas import tpu as pltpu

_EPS = 1e-9


def _cost_matrix_kernel(logits_ref, ids_ref, qbox_ref, tboxT_ref, c_ref,
                        *, w_class, w_bbox, w_giou, num_classes):
    # ---- class cost: softmax(logits)[:, tgt_ids], normalization deferred ----
    logits = logits_ref[...].astype(jnp.float32)                       # (Qp, C)
    m = jnp.max(logits, axis=-1, keepdims=True)
    e = jnp.exp(logits - m)                                            # (Qp, C)
    sum_e = jnp.sum(e, axis=-1, keepdims=True)                         # (Qp, 1)

    # one-hot built in-kernel from the padded id row (-1 pads -> zero columns)
    ids_row = ids_ref[...]                                             # (1, Tp)
    tp = ids_row.shape[1]
    class_iota = lax.broadcasted_iota(jnp.int32, (num_classes, tp), 0)  # (C, Tp)
    onehot = (class_iota == ids_row).astype(jnp.float32)               # (C, Tp)

    # column gather as MXU matmul; normalize afterwards (Qp x Tp multiply)
    g = jnp.dot(e, onehot, preferred_element_type=jnp.float32)         # (Qp, Tp)
    gathered = g * pl.reciprocal(sum_e)                                # (Qp, Tp)

    # ---- box components ------------------------------------------------------
    qcx = qbox_ref[:, 0:1]
    qcy = qbox_ref[:, 1:2]
    qw = qbox_ref[:, 2:3]
    qh = qbox_ref[:, 3:4]                                              # (Qp, 1)
    tcx = tboxT_ref[0:1, :]
    tcy = tboxT_ref[1:2, :]
    tw = tboxT_ref[2:3, :]
    th = tboxT_ref[3:4, :]                                             # (1, Tp)

    # ---- L1 cdist in cxcywh space (matches torch.cdist(p=1)) ----------------
    cost_bbox = (jnp.abs(qcx - tcx) + jnp.abs(qcy - tcy)
                 + jnp.abs(qw - tw) + jnp.abs(qh - th))                # (Qp, Tp)

    # ---- GIoU (boxes converted cxcywh -> xyxy) -------------------------------
    qx1 = qcx - 0.5 * qw
    qy1 = qcy - 0.5 * qh
    qx2 = qcx + 0.5 * qw
    qy2 = qcy + 0.5 * qh
    tx1 = tcx - 0.5 * tw
    ty1 = tcy - 0.5 * th
    tx2 = tcx + 0.5 * tw
    ty2 = tcy + 0.5 * th

    area_q = (qx2 - qx1) * (qy2 - qy1)                                 # (Qp, 1)
    area_t = (tx2 - tx1) * (ty2 - ty1)                                 # (1, Tp)

    lt_x = jnp.maximum(qx1, tx1)
    lt_y = jnp.maximum(qy1, ty1)
    rb_x = jnp.minimum(qx2, tx2)
    rb_y = jnp.minimum(qy2, ty2)
    inter = (jnp.maximum(rb_x - lt_x, 0.0) *
             jnp.maximum(rb_y - lt_y, 0.0))                            # (Qp, Tp)
    union = area_q + area_t - inter

    enc_x1 = jnp.minimum(qx1, tx1)
    enc_y1 = jnp.minimum(qy1, ty1)
    enc_x2 = jnp.maximum(qx2, tx2)
    enc_y2 = jnp.maximum(qy2, ty2)
    area_enc = (jnp.maximum(enc_x2 - enc_x1, 0.0) *
                jnp.maximum(enc_y2 - enc_y1, 0.0))                     # (Qp, Tp)

    # divides -> exact reciprocal-multiplies (eps clamp vs degenerate boxes)
    r_u = pl.reciprocal(jnp.maximum(union, _EPS))
    r_e = pl.reciprocal(jnp.maximum(area_enc, _EPS))
    iou = inter * r_u
    giou = iou - 1.0 + union * r_e      # == iou - (area_enc - union)/area_enc

    # ---- folded final combine ------------------------------------------------
    # w_bbox*L1 + w_class*(1-gathered) + w_giou*(1-giou)
    c_ref[...] = ((w_class + w_giou)
                  + w_bbox * cost_bbox
                  - w_class * gathered
                  - w_giou * giou).astype(c_ref.dtype)


def cost_matrix_pallas(pred_logits, pred_boxes, tgt_ids, tgt_boxes,
                       *, cost_class=1.0, cost_bbox=1.0, cost_giou=1.0):
    """Compute the matching cost matrix on TPU via Pallas.

    pred_logits: (Q, C) float (any dtype, upcast in-kernel)
    pred_boxes : (Q, 4) float, cxcywh
    tgt_ids    : (T,)   int class ids of tracked targets
    tgt_boxes  : (T, 4) float, cxcywh
    returns    : (Q, T) float32 cost matrix
    """
    Q, C = pred_logits.shape
    T = int(tgt_boxes.shape[0])
    Tp = max(128, ((T + 127) // 128) * 128)   # lane-dense track dimension
    Qp = max(8, ((Q + 7) // 8) * 8)           # sublane-dense query dimension

    # Pad ids with -1 (never matches a class id) and track boxes with zeros.
    ids_pad = jnp.full((1, Tp), -1, dtype=jnp.int32)
    ids_pad = ids_pad.at[0, :T].set(tgt_ids.astype(jnp.int32))
    tboxT_pad = jnp.zeros((4, Tp), dtype=jnp.float32)
    tboxT_pad = tboxT_pad.at[:, :T].set(tgt_boxes.astype(jnp.float32).T)

    logits_in = pred_logits
    qbox_in = pred_boxes.astype(jnp.float32)
    if Qp != Q:
        logits_in = jnp.pad(logits_in, ((0, Qp - Q), (0, 0)))
        qbox_in = jnp.pad(qbox_in, ((0, Qp - Q), (0, 0)))

    kernel = functools.partial(_cost_matrix_kernel,
                               w_class=float(cost_class),
                               w_bbox=float(cost_bbox),
                               w_giou=float(cost_giou),
                               num_classes=C)

    # TODO(synk): for production Q >= 256 on v7x, tile the grid over Q
    # (grid=(pl.cdiv(Qp, 128),), dimension_semantics=("parallel",)) to use
    # both TensorCores; at these shapes a single block is fastest.
    c_pad = pl.pallas_call(
        kernel,
        out_shape=jax.ShapeDtypeStruct((Qp, Tp), jnp.float32),
        grid=(1,),
        in_specs=[
            pl.BlockSpec((Qp, C), lambda i: (0, 0)),   # logits, native dtype
            pl.BlockSpec((1, Tp), lambda i: (0, 0)),   # padded track ids
            pl.BlockSpec((Qp, 4), lambda i: (0, 0)),   # query boxes
            pl.BlockSpec((4, Tp), lambda i: (0, 0)),   # padded track boxes^T
        ],
        out_specs=pl.BlockSpec((Qp, Tp), lambda i: (0, 0)),
        compiler_params=pltpu.CompilerParams(
            dimension_semantics=("arbitrary",)),
    )(logits_in, ids_pad, qbox_in, tboxT_pad)

    # Padded rows/columns carry meaningless costs -> slice them off before any
    # host-side Hungarian assignment.
    return c_pad[:Q, :T]


class TrackingMatcherJAX:
    """Minimal stateful wrapper mirroring tracking_matcher's frame0/frame1 flow."""

    def __init__(self, max_distance, cost_class=1.0, cost_bbox=1.0, cost_giou=1.0):
        assert cost_class != 0 or cost_bbox != 0 or cost_giou != 0
        self.max_distance = max_distance
        self.cost_class = cost_class
        self.cost_bbox = cost_bbox
        self.cost_giou = cost_giou
        self._labels = None   # (T,) int32
        self._boxes = None    # (T, 4) float32

    def reset(self):
        self._labels = None
        self._boxes = None

    def forward(self, outputs):
        pred_logits = outputs["pred_logits"]   # (1, Q, C)
        pred_boxes = outputs["pred_boxes"]     # (1, Q, 4)
        assert pred_logits.shape[0] == 1
        Q = pred_logits.shape[1]

        if pred_logits.size == 0:
            self.reset()
            return (), jnp.zeros((0,), jnp.float32)

        if self._labels is None:
            # frame 0: register all detections as new tracks.
            self._labels = jnp.argmax(pred_logits[0], axis=-1).astype(jnp.int32)
            self._boxes = pred_boxes[0].astype(jnp.float32)
            id_map = [(i, i) for i in range(Q)]
            return id_map, jnp.zeros((Q, Q), jnp.float32)

        # frame >= 1: cost matrix between current detections and tracked targets
        c = cost_matrix_pallas(
            pred_logits[0], pred_boxes[0], self._labels, self._boxes,
            cost_class=self.cost_class, cost_bbox=self.cost_bbox,
            cost_giou=self.cost_giou)
        # TODO(synk): linear_sum_assignment (Hungarian) + masked_tracking list
        # bookkeeping is sequential host-side logic with no Pallas equivalent.
        return None, c


def _reference_cost_matrix(pred_logits, pred_boxes, tgt_ids, tgt_boxes,
                           cost_class, cost_bbox, cost_giou):
    """Pure-numpy reference mirroring the PyTorch forward hot path."""
    logits = np.asarray(pred_logits, np.float32)
    out_bbox = np.asarray(pred_boxes, np.float32)
    tgt_ids = np.asarray(tgt_ids)
    tgt_bbox = np.asarray(tgt_boxes, np.float32)

    e = np.exp(logits - logits.max(-1, keepdims=True))
    prob = e / e.sum(-1, keepdims=True)
    c_class = 1.0 - prob[:, tgt_ids]
    c_bbox = np.abs(out_bbox[:, None, :] - tgt_bbox[None, :, :]).sum(-1)

    def to_xyxy(b):
        cx, cy, w, h = b[:, 0], b[:, 1], b[:, 2], b[:, 3]
        return np.stack([cx - w / 2, cy - h / 2, cx + w / 2, cy + h / 2], -1)

    b1, b2 = to_xyxy(out_bbox), to_xyxy(tgt_bbox)
    a1 = (b1[:, 2] - b1[:, 0]) * (b1[:, 3] - b1[:, 1])
    a2 = (b2[:, 2] - b2[:, 0]) * (b2[:, 3] - b2[:, 1])
    lt = np.maximum(b1[:, None, :2], b2[None, :, :2])
    rb = np.minimum(b1[:, None, 2:], b2[None, :, 2:])
    wh = np.clip(rb - lt, 0, None)
    inter = wh[..., 0] * wh[..., 1]
    union = a1[:, None] + a2[None, :] - inter
    iou = inter / union
    lti = np.minimum(b1[:, None, :2], b2[None, :, :2])
    rbi = np.maximum(b1[:, None, 2:], b2[None, :, 2:])
    whi = np.clip(rbi - lti, 0, None)
    areai = whi[..., 0] * whi[..., 1]
    giou = iou - (areai - union) / areai
    c_giou = 1.0 - giou
    return cost_bbox * c_bbox + cost_class * c_class + cost_giou * c_giou


if __name__ == "__main__":
    key = jax.random.PRNGKey(0)
    Q, C = 8, 16   # num_queries, num_classes

    def make_outputs(k):
        k1, k2, k3 = jax.random.split(k, 3)
        logits = jax.random.normal(k1, (1, Q, C), jnp.float32)
        centers = jax.random.uniform(k2, (1, Q, 2), jnp.float32, 0.2, 0.8)
        wh = jax.random.uniform(k3, (1, Q, 2), jnp.float32, 0.05, 0.3)
        boxes = jnp.concatenate([centers, wh], axis=-1)   # cxcywh
        return {"pred_logits": logits, "pred_boxes": boxes}

    k0, k1 = jax.random.split(key)
    frame0 = make_outputs(k0)
    frame1 = make_outputs(k1)

    matcher = TrackingMatcherJAX(max_distance=2.0,
                                 cost_class=1.0, cost_bbox=1.0, cost_giou=1.0)

    # frame 0: populates the tracking list (no kernel work, matches PyTorch path)
    _, c0 = matcher.forward(frame0)
    jax.block_until_ready(c0)

    # frame 1: cost matrix via the Pallas kernel
    _, c1 = matcher.forward(frame1)
    c1 = jax.block_until_ready(c1)

    ref = _reference_cost_matrix(
        frame1["pred_logits"][0], frame1["pred_boxes"][0],
        np.argmax(np.asarray(frame0["pred_logits"][0]), axis=-1),
        frame0["pred_boxes"][0],
        cost_class=1.0, cost_bbox=1.0, cost_giou=1.0)

    np.testing.assert_allclose(np.asarray(c1), ref, rtol=1e-5, atol=1e-5)
    print("KERNEL_OK")
</pallas_src>

<mosaic_0001>
module attributes {stable_mosaic.version = 11 : i64} {
  func.func @_cost_matrix_kernel(%arg0: i32, %arg1: memref<8x16xf32, #tpu.memory_space<vmem>>, %arg2: memref<1x128xi32, #tpu.memory_space<vmem>>, %arg3: memref<8x4xf32, #tpu.memory_space<vmem>>, %arg4: memref<4x128xf32, #tpu.memory_space<vmem>>, %arg5: memref<8x128xf32, #tpu.memory_space<vmem>>) attributes {dimension_semantics = [#tpu.dimension_semantics<arbitrary>], iteration_bounds = array<i64: 1>, scalar_prefetch = 0 : i64, scratch_operands = 0 : i64, tpu.core_type = #tpu.core_type<tc>, window_params = [{pipeline_mode = #tpu.pipeline_mode<synchronous>, transform_indices = @transform_0, window_bounds = array<i64: 8, 16>}, {pipeline_mode = #tpu.pipeline_mode<synchronous>, transform_indices = @transform_1, window_bounds = array<i64: 1, 128>}, {pipeline_mode = #tpu.pipeline_mode<synchronous>, transform_indices = @transform_2, window_bounds = array<i64: 8, 4>}, {pipeline_mode = #tpu.pipeline_mode<synchronous>, transform_indices = @transform_3, window_bounds = array<i64: 4, 128>}, {pipeline_mode = #tpu.pipeline_mode<synchronous>, transform_indices = @transform_4, window_bounds = array<i64: 8, 128>}]} {
    %c0 = arith.constant 0 : index
    %c0_0 = arith.constant 0 : index
    %0 = vector.load %arg1[%c0, %c0_0] : memref<8x16xf32, #tpu.memory_space<vmem>>, vector<8x16xf32>
    %cst = arith.constant dense<0xFF800000> : vector<8xf32>
    %1 = vector.multi_reduction <maximumf>, %0, %cst [1] : vector<8x16xf32> to vector<8xf32>
    %2 = vector.shape_cast %1 : vector<8xf32> to vector<8x1xf32>
    %3 = vector.broadcast %2 : vector<8x1xf32> to vector<8x16xf32>
    %4 = arith.subf %0, %3 : vector<8x16xf32>
    %5 = math.exp %4 : vector<8x16xf32>
    %cst_1 = arith.constant dense<0.000000e+00> : vector<8xf32>
    %6 = vector.multi_reduction <add>, %5, %cst_1 [1] : vector<8x16xf32> to vector<8xf32>
    %7 = vector.shape_cast %6 : vector<8xf32> to vector<8x1xf32>
    %c0_2 = arith.constant 0 : index
    %c0_3 = arith.constant 0 : index
    %8 = vector.load %arg2[%c0_2, %c0_3] : memref<1x128xi32, #tpu.memory_space<vmem>>, vector<1x128xi32>
    %9 = tpu.iota {dimensions = array<i32: 0>} : vector<16x128xi32>
    %10 = vector.broadcast %8 : vector<1x128xi32> to vector<16x128xi32>
    %11 = arith.cmpi eq, %9, %10 : vector<16x128xi32>
    %12 = arith.extui %11 : vector<16x128xi1> to vector<16x128xi32>
    %13 = arith.sitofp %12 : vector<16x128xi32> to vector<16x128xf32>
    %cst_4 = arith.constant dense<0.000000e+00> : vector<8x128xf32>
    %14 = tpu.matmul %5, %13, %cst_4 {dimension_numbers = #tpu.dot_dimension_numbers<[1], [0], [0], [1], [0, 0, 1, 1], [], []>} : vector<8x16xf32>, vector<16x128xf32>, vector<8x128xf32> -> vector<8x128xf32>
    %15 = tpu.reciprocal %7 : vector<8x1xf32> -> vector<8x1xf32>
    %16 = vector.broadcast %15 : vector<8x1xf32> to vector<8x128xf32>
    %17 = arith.mulf %14, %16 : vector<8x128xf32>
    %c0_5 = arith.constant 0 : index
    %c0_6 = arith.constant 0 : index
    %18 = vector.load %arg3[%c0_5, %c0_6] : memref<8x4xf32, #tpu.memory_space<vmem>>, vector<8x1xf32>
    %c0_7 = arith.constant 0 : index
    %c1 = arith.constant 1 : index
    %19 = vector.load %arg3[%c0_7, %c1] : memref<8x4xf32, #tpu.memory_space<vmem>>, vector<8x1xf32>
    %c0_8 = arith.constant 0 : index
    %c2 = arith.constant 2 : index
    %20 = vector.load %arg3[%c0_8, %c2] : memref<8x4xf32, #tpu.memory_space<vmem>>, vector<8x1xf32>
    %c0_9 = arith.constant 0 : index
    %c3 = arith.constant 3 : index
    %21 = vector.load %arg3[%c0_9, %c3] : memref<8x4xf32, #tpu.memory_space<vmem>>, vector<8x1xf32>
    %c0_10 = arith.constant 0 : index
    %c0_11 = arith.constant 0 : index
    %22 = vector.load %arg4[%c0_10, %c0_11] : memref<4x128xf32, #tpu.memory_space<vmem>>, vector<1x128xf32>
    %c1_12 = arith.constant 1 : index
    %c0_13 = arith.constant 0 : index
    %23 = vector.load %arg4[%c1_12, %c0_13] : memref<4x128xf32, #tpu.memory_space<vmem>>, vector<1x128xf32>
    %c2_14 = arith.constant 2 : index
    %c0_15 = arith.constant 0 : index
    %24 = vector.load %arg4[%c2_14, %c0_15] : memref<4x128xf32, #tpu.memory_space<vmem>>, vector<1x128xf32>
    %c3_16 = arith.constant 3 : index
    %c0_17 = arith.constant 0 : index
    %25 = vector.load %arg4[%c3_16, %c0_17] : memref<4x128xf32, #tpu.memory_space<vmem>>, vector<1x128xf32>
    %26 = vector.broadcast %18 : vector<8x1xf32> to vector<8x128xf32>
    %27 = vector.broadcast %22 : vector<1x128xf32> to vector<8x128xf32>
    %28 = arith.subf %26, %27 : vector<8x128xf32>
    %29 = math.absf %28 : vector<8x128xf32>
    %30 = vector.broadcast %19 : vector<8x1xf32> to vector<8x128xf32>
    %31 = vector.broadcast %23 : vector<1x128xf32> to vector<8x128xf32>
    %32 = arith.subf %30, %31 : vector<8x128xf32>
    %33 = math.absf %32 : vector<8x128xf32>
    %34 = arith.addf %29, %33 : vector<8x128xf32>
    %35 = vector.broadcast %20 : vector<8x1xf32> to vector<8x128xf32>
    %36 = vector.broadcast %24 : vector<1x128xf32> to vector<8x128xf32>
    %37 = arith.subf %35, %36 : vector<8x128xf32>
    %38 = math.absf %37 : vector<8x128xf32>
    %39 = arith.addf %34, %38 : vector<8x128xf32>
    %40 = vector.broadcast %21 : vector<8x1xf32> to vector<8x128xf32>
    %41 = vector.broadcast %25 : vector<1x128xf32> to vector<8x128xf32>
    %42 = arith.subf %40, %41 : vector<8x128xf32>
    %43 = math.absf %42 : vector<8x128xf32>
    %44 = arith.addf %39, %43 : vector<8x128xf32>
    %cst_18 = arith.constant 5.000000e-01 : f32
    %45 = vector.broadcast %cst_18 : f32 to vector<8x1xf32>
    %46 = arith.mulf %45, %20 : vector<8x1xf32>
    %47 = arith.subf %18, %46 : vector<8x1xf32>
    %cst_19 = arith.constant 5.000000e-01 : f32
    %48 = vector.broadcast %cst_19 : f32 to vector<8x1xf32>
    %49 = arith.mulf %48, %21 : vector<8x1xf32>
    %50 = arith.subf %19, %49 : vector<8x1xf32>
    %cst_20 = arith.constant 5.000000e-01 : f32
    %51 = vector.broadcast %cst_20 : f32 to vector<8x1xf32>
    %52 = arith.mulf %51, %20 : vector<8x1xf32>
    %53 = arith.addf %18, %52 : vector<8x1xf32>
    %cst_21 = arith.constant 5.000000e-01 : f32
    %54 = vector.broadcast %cst_21 : f32 to vector<8x1xf32>
    %55 = arith.mulf %54, %21 : vector<8x1xf32>
    %56 = arith.addf %19, %55 : vector<8x1xf32>
    %cst_22 = arith.constant 5.000000e-01 : f32
    %57 = vector.broadcast %cst_22 : f32 to vector<1x128xf32>
    %58 = arith.mulf %57, %24 : vector<1x128xf32>
    %59 = arith.subf %22, %58 : vector<1x128xf32>
    %cst_23 = arith.constant 5.000000e-01 : f32
    %60 = vector.broadcast %cst_23 : f32 to vector<1x128xf32>
    %61 = arith.mulf %60, %25 : vector<1x128xf32>
    %62 = arith.subf %23, %61 : vector<1x128xf32>
    %cst_24 = arith.constant 5.000000e-01 : f32
    %63 = vector.broadcast %cst_24 : f32 to vector<1x128xf32>
    %64 = arith.mulf %63, %24 : vector<1x128xf32>
    %65 = arith.addf %22, %64 : vector<1x128xf32>
    %cst_25 = arith.constant 5.000000e-01 : f32
    %66 = vector.broadcast %cst_25 : f32 to vector<1x128xf32>
    %67 = arith.mulf %66, %25 : vector<1x128xf32>
    %68 = arith.addf %23, %67 : vector<1x128xf32>
    %69 = arith.subf %53, %47 : vector<8x1xf32>
    %70 = arith.subf %56, %50 : vector<8x1xf32>
    %71 = arith.mulf %69, %70 : vector<8x1xf32>
    %72 = arith.subf %65, %59 : vector<1x128xf32>
    %73 = arith.subf %68, %62 : vector<1x128xf32>
    %74 = arith.mulf %72, %73 : vector<1x128xf32>
    %75 = vector.broadcast %47 : vector<8x1xf32> to vector<8x128xf32>
    %76 = vector.broadcast %59 : vector<1x128xf32> to vector<8x128xf32>
    %77 = arith.maximumf %75, %76 : vector<8x128xf32>
    %78 = vector.broadcast %50 : vector<8x1xf32> to vector<8x128xf32>
    %79 = vector.broadcast %62 : vector<1x128xf32> to vector<8x128xf32>
    %80 = arith.maximumf %78, %79 : vector<8x128xf32>
    %81 = vector.broadcast %53 : vector<8x1xf32> to vector<8x128xf32>
    %82 = vector.broadcast %65 : vector<1x128xf32> to vector<8x128xf32>
    %83 = arith.minimumf %81, %82 : vector<8x128xf32>
    %84 = vector.broadcast %56 : vector<8x1xf32> to vector<8x128xf32>
    %85 = vector.broadcast %68 : vector<1x128xf32> to vector<8x128xf32>
    %86 = arith.minimumf %84, %85 : vector<8x128xf32>
    %87 = arith.subf %83, %77 : vector<8x128xf32>
    %cst_26 = arith.constant 0.000000e+00 : f32
    %88 = vector.broadcast %cst_26 : f32 to vector<8x128xf32>
    %89 = arith.maximumf %87, %88 : vector<8x128xf32>
    %90 = arith.subf %86, %80 : vector<8x128xf32>
    %cst_27 = arith.constant 0.000000e+00 : f32
    %91 = vector.broadcast %cst_27 : f32 to vector<8x128xf32>
    %92 = arith.maximumf %90, %91 : vector<8x128xf32>
    %93 = arith.mulf %89, %92 : vector<8x128xf32>
    %94 = vector.broadcast %71 : vector<8x1xf32> to vector<8x128xf32>
    %95 = vector.broadcast %74 : vector<1x128xf32> to vector<8x128xf32>
    %96 = arith.addf %94, %95 : vector<8x128xf32>
    %97 = arith.subf %96, %93 : vector<8x128xf32>
    %98 = vector.broadcast %47 : vector<8x1xf32> to vector<8x128xf32>
    %99 = vector.broadcast %59 : vector<1x128xf32> to vector<8x128xf32>
    %100 = arith.minimumf %98, %99 : vector<8x128xf32>
    %101 = vector.broadcast %50 : vector<8x1xf32> to vector<8x128xf32>
    %102 = vector.broadcast %62 : vector<1x128xf32> to vector<8x128xf32>
    %103 = arith.minimumf %101, %102 : vector<8x128xf32>
    %104 = vector.broadcast %53 : vector<8x1xf32> to vector<8x128xf32>
    %105 = vector.broadcast %65 : vector<1x128xf32> to vector<8x128xf32>
    %106 = arith.maximumf %104, %105 : vector<8x128xf32>
    %107 = vector.broadcast %56 : vector<8x1xf32> to vector<8x128xf32>
    %108 = vector.broadcast %68 : vector<1x128xf32> to vector<8x128xf32>
    %109 = arith.maximumf %107, %108 : vector<8x128xf32>
    %110 = arith.subf %106, %100 : vector<8x128xf32>
    %cst_28 = arith.constant 0.000000e+00 : f32
    %111 = vector.broadcast %cst_28 : f32 to vector<8x128xf32>
    %112 = arith.maximumf %110, %111 : vector<8x128xf32>
    %113 = arith.subf %109, %103 : vector<8x128xf32>
    %cst_29 = arith.constant 0.000000e+00 : f32
    %114 = vector.broadcast %cst_29 : f32 to vector<8x128xf32>
    %115 = arith.maximumf %113, %114 : vector<8x128xf32>
    %116 = arith.mulf %112, %115 : vector<8x128xf32>
    %cst_30 = arith.constant 9.99999971E-10 : f32
    %117 = vector.broadcast %cst_30 : f32 to vector<8x128xf32>
    %118 = arith.maximumf %97, %117 : vector<8x128xf32>
    %119 = tpu.reciprocal %118 : vector<8x128xf32> -> vector<8x128xf32>
    %cst_31 = arith.constant 9.99999971E-10 : f32
    %120 = vector.broadcast %cst_31 : f32 to vector<8x128xf32>
    %121 = arith.maximumf %116, %120 : vector<8x128xf32>
    %122 = tpu.reciprocal %121 : vector<8x128xf32> -> vector<8x128xf32>
    %123 = arith.mulf %93, %119 : vector<8x128xf32>
    %cst_32 = arith.constant 1.000000e+00 : f32
    %124 = vector.broadcast %cst_32 : f32 to vector<8x128xf32>
    %125 = arith.subf %123, %124 : vector<8x128xf32>
    %126 = arith.mulf %97, %122 : vector<8x128xf32>
    %127 = arith.addf %125, %126 : vector<8x128xf32>
    %cst_33 = arith.constant 1.000000e+00 : f32
    %128 = vector.broadcast %cst_33 : f32 to vector<8x128xf32>
    %129 = arith.mulf %128, %44 : vector<8x128xf32>
    %cst_34 = arith.constant 2.000000e+00 : f32
    %130 = vector.broadcast %cst_34 : f32 to vector<8x128xf32>
    %131 = arith.addf %130, %129 : vector<8x128xf32>
    %cst_35 = arith.constant 1.000000e+00 : f32
    %132 = vector.broadcast %cst_35 : f32 to vector<8x128xf32>
    %133 = arith.mulf %132, %17 : vector<8x128xf32>
    %134 = arith.subf %131, %133 : vector<8x128xf32>
    %cst_36 = arith.constant 1.000000e+00 : f32
    %135 = vector.broadcast %cst_36 : f32 to vector<8x128xf32>
    %136 = arith.mulf %135, %127 : vector<8x128xf32>
    %137 = arith.subf %134, %136 : vector<8x128xf32>
    %c0_37 = arith.constant 0 : index
    %c0_38 = arith.constant 0 : index
    %138 = vector.load %arg5[%c0_37, %c0_38] : memref<8x128xf32, #tpu.memory_space<vmem>>, vector<8x128xf32>
    tpu.vector_store %arg5[%c0_37, %c0_38], %137 {strides = array<i32>} : memref<8x128xf32, #tpu.memory_space<vmem>>, vector<8x128xf32>,
    return
  }
  func.func @transform_0(%arg0: i32) -> (i32, i32) {
    %c0_i32 = arith.constant 0 : i32
    %c0_i32_0 = arith.constant 0 : i32
    %c0_i32_1 = arith.constant 0 : i32
    return %c0_i32, %c0_i32_0 : i32, i32
  }
  func.func @transform_1(%arg0: i32) -> (i32, i32) {
    %c0_i32 = arith.constant 0 : i32
    %c0_i32_0 = arith.constant 0 : i32
    %c0_i32_1 = arith.constant 0 : i32
    return %c0_i32, %c0_i32_0 : i32, i32
  }
  func.func @transform_2(%arg0: i32) -> (i32, i32) {
    %c0_i32 = arith.constant 0 : i32
    %c0_i32_0 = arith.constant 0 : i32
    %c0_i32_1 = arith.constant 0 : i32
    return %c0_i32, %c0_i32_0 : i32, i32
  }
  func.func @transform_3(%arg0: i32) -> (i32, i32) {
    %c0_i32 = arith.constant 0 : i32
    %c0_i32_0 = arith.constant 0 : i32
    %c0_i32_1 = arith.constant 0 : i32
    return %c0_i32, %c0_i32_0 : i32, i32
  }
  func.func @transform_4(%arg0: i32) -> (i32, i32) {
    %c0_i32 = arith.constant 0 : i32
    %c0_i32_0 = arith.constant 0 : i32
    %c0_i32_1 = arith.constant 0 : i32
    return %c0_i32, %c0_i32_0 : i32, i32
  }
}

</mosaic_0001>

<llo_original>
// kernel: tpu_custom_call.1
$region0: #{tpu_custom_call.1}
  #allocation0 [shape = 'u32[]', space=smem, size = 0x4, offset = 0x4, fixed_abs, tag = 'smem constant byte address 0x4 - core index']
  #allocation1 [shape = 'u32[144,128]{1,0:T(1,128)}', space=vmem, size = 0x12000, scoped, tag = 'internal scratch']
  %s0 = inlined_call_operand.vmem [shape: f32[8,16], index: 0, kind: input, shape index: {}]
  %s1 = inlined_call_operand.vmem [shape: s32[1,128], index: 1, kind: input, shape index: {}]
  %s2 = inlined_call_operand.vmem [shape: f32[8,4], index: 2, kind: input, shape index: {}]
  %s3 = inlined_call_operand.vmem [shape: f32[4,128], index: 3, kind: input, shape index: {}]
  %s4 = inlined_call_operand.hbm [shape: f32[8,128], index: 4, kind: output, shape index: {}]
  %s5 = sld [smem:[#allocation0]]
  $region26: #{tpu_custom_call.1} parent=0
    _
  %s7 = ssub.s32 1, %s5
  %s8 = scalar_select 0, %s7, %s5
  $region1: #{tpu_custom_call.1} parent=0
    #allocation2 [shape = 'u8[4096]{0}', space=vmem, size = 0x1000, scoped, tag = 'output window, operand 0, single buffered']
    #allocation3 [shape = 's32[1]{0}', space=sflag, size = 0x4, scoped, tag = 'scoped memory for tpu_custom_call.1']
    %9 = vsyncpa [#allocation3], 0
    // Predicated region
    $region2: #{tpu_custom_call.1} parent=1 // pred_check
      _
    $region3: #{tpu_custom_call.1} parent=1 // pred_check_branch
      %11 = sbr.rel (0) target = $region5
    $region4: #{tpu_custom_call.1} parent=1 // pred_region
      _
    $region5: #{tpu_custom_call.1} parent=1 // pred_fallthru
      _
    // Predicated region
    $region6: #{tpu_custom_call.1} parent=1 // pred_check
      _
    $region7: #{tpu_custom_call.1} parent=1 // pred_check_branch
      %13 = sbr.rel (0) target = $region9
    $region8: #{tpu_custom_call.1} parent=1 // pred_region
      _
    $region9: #{tpu_custom_call.1} parent=1 // pred_fallthru
      _
    // Predicated region
    $region10: #{tpu_custom_call.1} parent=1 // pred_check
      _
    $region11: #{tpu_custom_call.1} parent=1 // pred_check_branch
      %15 = sbr.rel (0) target = $region13
    $region12: #{tpu_custom_call.1} parent=1 // pred_region
      _
    $region13: #{tpu_custom_call.1} parent=1 // pred_fallthru
      _
    // Predicated region
    $region14: #{tpu_custom_call.1} parent=1 // pred_check
      _
    $region15: #{tpu_custom_call.1} parent=1 // pred_check_branch
      %17 = sbr.rel (0) target = $region17
    $region16: #{tpu_custom_call.1} parent=1 // pred_region
      _
    $region17: #{tpu_custom_call.1} parent=1 // pred_fallthru
      _
    %v18 = vld [vmem:[%s0] sm:$0xff]
    %vm19 = vcmask 130048
    %v20 = vsel %vm19, %v18, -inf
    %21 = vmax.xlane.f32.xlu0 %v20
    %v22 = vpop.xlane.xlu0 %21
    %v23 = vsub.f32 %v18, %v22
    %v24 = vmul.f32 %v23, 1.442695
    %v25 = vpow.pop %v24
    %v26 = vsel %vm19, %v25, 0.0
    %27 = vadd.xlane.f32.xlu0 %v26
    %v28 = vpop.xlane.xlu0 %27
    %v29 = vld [vmem:[%s1] sm:$0x1]
    %v30 = vlaneseq
    %v31 = vshrl.u32 %v30, 7
    %v32 = vadd.s32 %v31, 8
    %v33 = vlaneseq
    %v34 = vshrl.u32 %v33, 7
    %v35 = vsub.s32 0, %v34
    %v36 = vrot.slane %v29, %v35
    %vm37 = vcmp.eq.s32.totalorder %v31, %v36
    %vm38 = vcmp.eq.s32.totalorder %v32, %v36
    %v39 = vsel %vm37, 1, 0
    %v40 = vsel %vm38, 1, 0
    %v41 = vcvt.s32.f32 %v39
    %v42 = vcvt.s32.f32 %v40
    %v44 = vsel %vm19, %v25, 0
    %46 = vmatprep.subr.mxu0 0.0
    %47 = vmatpush1.msra.mxu0 0.0
    %48 = vmatprep.subr.mxu0 0.0
    %49 = vmatpush1.msra.mxu0 0.0
    %50 = vmatprep.subr.mxu0 0.0
    %51 = vmatpush1.msra.mxu0 0.0
    %52 = vmatprep.subr.mxu0 0.0
    %53 = vmatpush1.msra.mxu0 0.0
    %54 = vmatprep.subr.mxu0 0.0
    %55 = vmatpush1.msra.mxu0 0.0
    %56 = vmatprep.subr.mxu0 0.0
    %57 = vmatpush1.msra.mxu0 0.0
    %58 = vmatprep.subr.mxu0 0.0
    %59 = vmatpush1.msra.mxu0 0.0
    %60 = vmatprep.subr.mxu0 0.0
    %61 = vmatpush1.msra.mxu0 0.0
    %62 = vmatprep.subr.mxu0 0.0
    %63 = vmatpush1.msra.mxu0 0.0
    %64 = vmatprep.subr.mxu0 0.0
    %65 = vmatpush1.msra.mxu0 0.0
    %66 = vmatprep.subr.mxu0 0.0
    %67 = vmatpush1.msra.mxu0 0.0
    %68 = vmatprep.subr.mxu0 0.0
    %69 = vmatpush1.msra.mxu0 0.0
    %70 = vmatprep.subr.mxu0 0.0
    %71 = vmatpush1.msra.mxu0 0.0
    %72 = vmatprep.subr.mxu0 0.0
    %73 = vmatpush1.msra.mxu0 0.0
    %74 = vmatprep.subr.mxu0 0.0
    %75 = vmatpush1.msra.mxu0 %v42
    %76 = vmatprep.subr.mxu0 0.0
    %77 = vmatpush1.msra.mxu0 %v41
    %78 = vmatprep.subr.mxu0 0.0
    %79 = vmatpush2.msra.mxu0 0.0
    %80 = vmatprep.subr.mxu0 0.0
    %81 = vmatpush2.msra.mxu0 0.0
    %82 = vmatprep.subr.mxu0 0.0
    %83 = vmatpush2.msra.mxu0 0.0
    %84 = vmatprep.subr.mxu0 0.0
    %85 = vmatpush2.msra.mxu0 0.0
    %86 = vmatprep.subr.mxu0 0.0
    %87 = vmatpush2.msra.mxu0 0.0
    %88 = vmatprep.subr.mxu0 0.0
    %89 = vmatpush2.msra.mxu0 0.0
    %90 = vmatprep.subr.mxu0 0.0
    %91 = vmatpush2.msra.mxu0 0.0
    %92 = vmatprep.subr.mxu0 0.0
    %93 = vmatpush2.msra.mxu0 0.0
    %94 = vmatprep.subr.mxu0 0.0
    %95 = vmatpush2.msra.mxu0 0.0
    %96 = vmatprep.subr.mxu0 0.0
    %97 = vmatpush2.msra.mxu0 0.0
    %98 = vmatprep.subr.mxu0 0.0
    %99 = vmatpush2.msra.mxu0 0.0
    %100 = vmatprep.subr.mxu0 0.0
    %101 = vmatpush2.msra.mxu0 0.0
    %102 = vmatprep.subr.mxu0 0.0
    %103 = vmatpush2.msra.mxu0 0.0
    %104 = vmatprep.subr.mxu0 0.0
    %105 = vmatpush2.msra.mxu0 0.0
    %106 = vmatprep.subr.mxu0 0.0
    %107 = vmatpush2.msra.mxu0 0.0
    %108 = vmatprep.subr.mxu0 0.0
    %109 = vmatpush2.msra.mxu0 0.0
    %110 = vmatprep.mubr.f32.mxu0 0.0
    %111 = vmatmul.mubr.f32.gmra.mxu0 %v44
    %v112 = vpop.f32.mrf.mxu0
    %v113 = vadd.f32 0.0, %v112
    %v114 = vpop.f32.mrf.mxu0
    %115 = vdwg.mxu0
    %v116 = vrcp.pop %v28
    %v117 = vmul.f32 %v113, %v116
    %v118 = vld [vmem:[%s2] sm:$0xff]
    %v119 = vld [vmem:[%s3] sm:$0x1]
    %v120 = vld [vmem:[%s3 + $0x1] sm:$0x1]
    %v121 = vld [vmem:[%s3 + $0x2] sm:$0x1]
    %v122 = vld [vmem:[%s3 + $0x3] sm:$0x1]
    %124 = vset.pattern.permute.xlu0 0
    %125 = vperm.xlu0 %124, %v118
    %v126 = vpop.permute.xlu0 %125
    %v128 = vlaneseq
    %v129 = vshrl.u32 %v128, 7
    %v130 = vsub.s32 0, %v129
    %v131 = vrot.slane %v119, %v130
    %v132 = vsub.f32 %v126, %v131
    %v133 = vand.u32 2147483647, %v132
    %134 = vset.pattern.permute.xlu0 1
    %135 = vperm.xlu0 %134, %v118
    %v136 = vpop.permute.xlu0 %135
    %v138 = vlaneseq
    %v139 = vshrl.u32 %v138, 7
    %v140 = vsub.s32 0, %v139
    %v141 = vrot.slane %v120, %v140
    %v142 = vsub.f32 %v136, %v141
    %v143 = vand.u32 2147483647, %v142
    %v144 = vadd.f32 %v133, %v143
    %145 = vset.pattern.permute.xlu0 2
    %146 = vperm.xlu0 %145, %v118
    %v147 = vpop.permute.xlu0 %146
    %v149 = vlaneseq
    %v150 = vshrl.u32 %v149, 7
    %v151 = vsub.s32 0, %v150
    %v152 = vrot.slane %v121, %v151
    %v153 = vsub.f32 %v147, %v152
    %v154 = vand.u32 2147483647, %v153
    %v155 = vadd.f32 %v144, %v154
    %156 = vset.pattern.permute.xlu0 3
    %157 = vperm.xlu0 %156, %v118
    %v158 = vpop.permute.xlu0 %157
    %v160 = vlaneseq
    %v161 = vshrl.u32 %v160, 7
    %v162 = vsub.s32 0, %v161
    %v163 = vrot.slane %v122, %v162
    %v164 = vsub.f32 %v158, %v163
    %v165 = vand.u32 2147483647, %v164
    %v166 = vadd.f32 %v155, %v165
    %v167 = vmul.f32 %v118, 0.5
    %169 = vrot.lane.b32.xlu0 %v167, 126
    %v170 = vpop.permute.xlu0 %169
    %v172 = vsub.f32 %v118, %v170
    %v173 = vadd.f32 %v118, %v170
    %v174 = vmul.f32 %v121, 0.5
    %v175 = vsub.f32 %v119, %v174
    %v176 = vmul.f32 %v122, 0.5
    %v177 = vsub.f32 %v120, %v176
    %v178 = vadd.f32 %v119, %v174
    %v179 = vadd.f32 %v120, %v176
    %v180 = vsub.f32 %v173, %v172
    %182 = vrot.lane.b32.xlu0 %v180, 127
    %v183 = vpop.permute.xlu0 %182
    %v185 = vmul.f32 %v180, %v183
    %v186 = vsub.f32 %v178, %v175
    %v187 = vsub.f32 %v179, %v177
    %v188 = vmul.f32 %v186, %v187
    %190 = vset.pattern.permute.xlu0 0
    %191 = vperm.xlu0 %190, %v172
    %v192 = vpop.permute.xlu0 %191
    %v194 = vlaneseq
    %v195 = vshrl.u32 %v194, 7
    %v196 = vsub.s32 0, %v195
    %v197 = vrot.slane %v175, %v196
    %v198 = vmax.f32 %v192, %v197
    %199 = vset.pattern.permute.xlu0 1
    %200 = vperm.xlu0 %199, %v172
    %v201 = vpop.permute.xlu0 %200
    %v203 = vlaneseq
    %v204 = vshrl.u32 %v203, 7
    %v205 = vsub.s32 0, %v204
    %v206 = vrot.slane %v177, %v205
    %v207 = vmax.f32 %v201, %v206
    %209 = vset.pattern.permute.xlu0 0
    %210 = vperm.xlu0 %209, %v173
    %v211 = vpop.permute.xlu0 %210
    %v213 = vlaneseq
    %v214 = vshrl.u32 %v213, 7
    %v215 = vsub.s32 0, %v214
    %v216 = vrot.slane %v178, %v215
    %v217 = vmin.f32 %v211, %v216
    %218 = vset.pattern.permute.xlu0 1
    %219 = vperm.xlu0 %218, %v173
    %v220 = vpop.permute.xlu0 %219
    %v222 = vlaneseq
    %v223 = vshrl.u32 %v222, 7
    %v224 = vsub.s32 0, %v223
    %v225 = vrot.slane %v179, %v224
    %v226 = vmin.f32 %v220, %v225
    %v227 = vsub.f32 %v217, %v198
    %v228 = vmax.f32 %v227, 0.0
    %v229 = vsub.f32 %v226, %v207
    %v230 = vmax.f32 %v229, 0.0
    %v231 = vmul.f32 %v228, %v230
    %233 = vset.pattern.permute.xlu0 0
    %234 = vperm.xlu0 %233, %v185
    %v235 = vpop.permute.xlu0 %234
    %v237 = vlaneseq
    %v238 = vshrl.u32 %v237, 7
    %v239 = vsub.s32 0, %v238
    %v240 = vrot.slane %v188, %v239
    %v241 = vadd.f32 %v235, %v240
    %v242 = vsub.f32 %v241, %v231
    %v243 = vmin.f32 %v192, %v197
    %v244 = vmin.f32 %v201, %v206
    %v245 = vmax.f32 %v211, %v216
    %v246 = vmax.f32 %v220, %v225
    %v247 = vsub.f32 %v245, %v243
    %v248 = vmax.f32 %v247, 0.0
    %v249 = vsub.f32 %v246, %v244
    %v250 = vmax.f32 %v249, 0.0
    %v251 = vmul.f32 %v248, %v250
    %v252 = vmax.f32 %v242, 1e-09
    %v253 = vrcp.pop %v252
    %v254 = vmax.f32 %v251, 1e-09
    %v255 = vrcp.pop %v254
    %v256 = vmul.f32 %v231, %v253
    %v257 = vsub.f32 %v256, 1.0
    %v258 = vmul.f32 %v242, %v255
    %v259 = vadd.f32 %v257, %v258
    %v260 = vadd.f32 %v166, 2.0
    %v261 = vsub.f32 %v260, %v117
    %v262 = vsub.f32 %v261, %v259
    %263 = vst [vmem:[#allocation2] sm:$0xff] %v262
    // Predicated region
    $region18: #{tpu_custom_call.1} parent=1 // pred_check
      _
    $region19: #{tpu_custom_call.1} parent=1 // pred_check_branch
      %265 = sbr.rel (0) target = $region21
    $region20: #{tpu_custom_call.1} parent=1 // pred_region
      %s267 = ssub.s32 128, 128
      %268 = vsyncadd [#allocation3], %s267
      %s270 = sshll.u32 [#allocation2], 4
      %s271 = int_to_ptr.vmem [resolvable:$true] %s270
      %273 = dma.vmem_to_hbm [thread:$0]  %s271, 128, %s4, [#allocation3]
    $region21: #{tpu_custom_call.1} parent=1 // pred_fallthru
      _
    // Predicated region
    $region22: #{tpu_custom_call.1} parent=1 // pred_check
      _
    $region23: #{tpu_custom_call.1} parent=1 // pred_check_branch
      %275 = sbr.rel (0) target = $region25
    $region24: #{tpu_custom_call.1} parent=1 // pred_region
      %276 = dma.done [#allocation3], 128
    $region25: #{tpu_custom_call.1} parent=1 // pred_fallthru
      _
    %277 = vsyncpa [#allocation3], 1

</llo_original>
